<compile_context>
chip_gen: v7x
topology: tpu7x:2x2x1
jax: 0.10.0
libtpu: 0.0.40
codegen_flags: <defaults>
</compile_context>

<pallas_src>
import functools

import jax
import jax.numpy as jnp
from jax.experimental import pallas as pl
from jax.experimental.pallas import tpu as pltpu

EPS = 1e-5
_DIMS = [(80, 80), (80, 40), (40, 32)]  # (in, out) per Linear_Layer


def _linear_relu_ln(x, w, pk, *, bf16_matmul):
    """h = LayerNorm(ReLU(x @ w + b)); pk is (3, fout) packed [bias; gamma; beta]."""
    if bf16_matmul:
        # MXU fast path on v6e/v7x: bf16 operands, f32 accumulation.
        h = jnp.dot(x.astype(jnp.bfloat16), w.astype(jnp.bfloat16),
                    preferred_element_type=jnp.float32)
    else:
        h = jnp.dot(x, w, preferred_element_type=jnp.float32)

    bias = pk[0:1, :]
    gamma = pk[1:2, :]
    beta = pk[2:3, :]

    h = jnp.maximum(h + bias, 0.0)                       # bias + ReLU (f32, VPU)

    # One-pass LN stats: var = E[h^2] - E[h]^2 (post-ReLU values are bounded, so
    # cancellation risk is mild; clamp at 0 for safety).
    mean = jnp.mean(h, axis=-1, keepdims=True)
    mean_sq = jnp.mean(h * h, axis=-1, keepdims=True)
    var = jnp.maximum(mean_sq - mean * mean, 0.0)

    return (h - mean) * jax.lax.rsqrt(var + EPS) * gamma + beta


def mlp_genes_kernel(x_ref,
                     w1_ref, p1_ref,
                     w2_ref, p2_ref,
                     w3_ref, p3_ref,
                     out_ref, *, bf16_matmul):
    x = x_ref[...].astype(jnp.float32)

    # layer_1: Linear(80 -> 80) + ReLU + LayerNorm(80)
    h1 = _linear_relu_ln(x, w1_ref[...], p1_ref[...], bf16_matmul=bf16_matmul)
    # layer_2: Linear(80 -> 40) + ReLU + LayerNorm(40)
    h2 = _linear_relu_ln(h1, w2_ref[...], p2_ref[...], bf16_matmul=bf16_matmul)
    # dropout (p=0.1): identity at inference time
    # layer_3: Linear(40 -> 32) + ReLU + LayerNorm(32)
    h3 = _linear_relu_ln(h2, w3_ref[...], p3_ref[...], bf16_matmul=bf16_matmul)
    # dropout (p=0.1): identity at inference time

    out_ref[...] = h3.astype(out_ref.dtype)


def _default_tile_b(B):
    """Largest multiple-of-8 divisor of B, capped at 2048 rows, with >=2 grid
    steps when B >= 16 (so both v7x TensorCores get work)."""
    if B <= 8 or B % 8 != 0:
        return B  # single full-extent block (allowed by the (8,128) rule)
    cap = min(2048, B // 2) if B >= 16 else B
    cap = max(cap, 8)
    best = None
    for t in range(8, cap + 1, 8):
        if B % t == 0:
            best = t
    return best if best is not None else B


def mlp_genes_forward(x, params, *, tile_b=None, bf16_matmul=False):
    B, F_in = x.shape
    assert F_in == 80
    w1, p1, w2, p2, w3, p3 = params
    F_out = w3.shape[1]

    if tile_b is None:
        tile_b = _default_tile_b(B)
    assert B % tile_b == 0, "tile_b must divide the batch size"
    assert tile_b == B or tile_b % 8 == 0, \
        "tile_b must be a multiple of 8 (f32 sublanes) or the full batch"

    grid = (B // tile_b,)

    def full_spec(shape):
        # Small parameter tensors: whole array as one block, same block every step
        # -> stays resident in VMEM across the grid.
        return pl.BlockSpec(shape, lambda i: tuple(0 for _ in shape))

    in_specs = [
        pl.BlockSpec((tile_b, F_in), lambda i: (i, 0)),   # x tile (streamed)
        full_spec(w1.shape), full_spec(p1.shape),
        full_spec(w2.shape), full_spec(p2.shape),
        full_spec(w3.shape), full_spec(p3.shape),
    ]
    out_specs = pl.BlockSpec((tile_b, F_out), lambda i: (i, 0))

    kernel = functools.partial(mlp_genes_kernel, bf16_matmul=bf16_matmul)

    return pl.pallas_call(
        kernel,
        out_shape=jax.ShapeDtypeStruct((B, F_out), jnp.float32),
        grid_spec=pltpu.PrefetchScalarGridSpec(
            num_scalar_prefetch=0,
            grid=grid,
            in_specs=in_specs,
            out_specs=out_specs,
        ),
        compiler_params=pltpu.CompilerParams(
            dimension_semantics=("parallel",),
        ),
    )(x, w1, p1, w2, p2, w3, p3)


def init_params(key):
    """Deterministic init. Weights stored as (in, out) so the kernel does x @ w.
       Per-layer bias / LN gamma / LN beta packed into one (3, out) array."""
    params = []
    for (fin, fout) in _DIMS:
        key, k_w, k_b, k_g, k_be = jax.random.split(key, 5)
        bound = 1.0 / (fin ** 0.5)  # PyTorch nn.Linear default init range
        w = jax.random.uniform(k_w, (fin, fout), jnp.float32, -bound, bound)
        b = jax.random.uniform(k_b, (1, fout), jnp.float32, -bound, bound)
        # LayerNorm defaults are gamma=1, beta=0; perturb deterministically so the
        # affine path is actually exercised.
        g = 1.0 + 0.01 * jax.random.normal(k_g, (1, fout), jnp.float32)
        be = 0.01 * jax.random.normal(k_be, (1, fout), jnp.float32)
        params.append(w)
        params.append(jnp.concatenate([b, g, be], axis=0))  # (3, fout)
    return tuple(params)


def reference_forward(x, params, *, bf16_matmul=False):
    w1, p1, w2, p2, w3, p3 = params

    def layer(h, w, pk):
        if bf16_matmul:
            z = jnp.dot(h.astype(jnp.bfloat16), w.astype(jnp.bfloat16),
                        preferred_element_type=jnp.float32)
        else:
            z = jnp.dot(h, w, preferred_element_type=jnp.float32)
        z = jnp.maximum(z + pk[0:1, :], 0.0)
        mean = jnp.mean(z, axis=-1, keepdims=True)
        var = jnp.mean((z - mean) ** 2, axis=-1, keepdims=True)
        return (z - mean) / jnp.sqrt(var + EPS) * pk[1:2, :] + pk[2:3, :]

    h = layer(x, w1, p1)
    h = layer(h, w2, p2)
    h = layer(h, w3, p3)
    return h


if __name__ == "__main__":
    key = jax.random.PRNGKey(0)
    k_x, k_p = jax.random.split(key)
    params = init_params(k_p)

    # Small shape consistent with the module: batch=8, features=80.
    B = 8
    x = jax.random.normal(k_x, (B, 80), jnp.float32)

    # 1) default f32 MXU path
    out = jax.block_until_ready(mlp_genes_forward(x, params))
    ref = reference_forward(x, params)
    assert out.shape == (B, 32)
    assert jnp.allclose(out, ref, atol=1e-4, rtol=1e-4), "f32 path mismatch vs JAX reference"

    # 2) bf16-operand MXU path (v6e/v7x fast path), checked against a matching
    #    bf16-matmul JAX reference.
    out_bf16 = jax.block_until_ready(mlp_genes_forward(x, params, bf16_matmul=True))
    ref_bf16 = reference_forward(x, params, bf16_matmul=True)
    assert jnp.allclose(out_bf16, ref_bf16, atol=5e-3, rtol=5e-3), "bf16 path mismatch"

    # 3) multi-step grid (>=2 pipelined steps) at a small size, exercising the
    #    tiled path used for large batches.
    B2 = 32
    x2 = jax.random.normal(k_x, (B2, 80), jnp.float32)
    out2 = jax.block_until_ready(mlp_genes_forward(x2, params, tile_b=16))
    ref2 = reference_forward(x2, params)
    assert out2.shape == (B2, 32)
    assert jnp.allclose(out2, ref2, atol=1e-4, rtol=1e-4), "tiled path mismatch vs JAX reference"

    print("KERNEL_OK")
</pallas_src>

<mosaic_0001>
module attributes {stable_mosaic.version = 11 : i64} {
  func.func @mlp_genes_kernel(%arg0: i32, %arg1: memref<8x80xf32, #tpu.memory_space<vmem>>, %arg2: memref<80x80xf32, #tpu.memory_space<vmem>>, %arg3: memref<3x80xf32, #tpu.memory_space<vmem>>, %arg4: memref<80x40xf32, #tpu.memory_space<vmem>>, %arg5: memref<3x40xf32, #tpu.memory_space<vmem>>, %arg6: memref<40x32xf32, #tpu.memory_space<vmem>>, %arg7: memref<3x32xf32, #tpu.memory_space<vmem>>, %arg8: memref<8x32xf32, #tpu.memory_space<vmem>>) attributes {dimension_semantics = [#tpu.dimension_semantics<parallel>], iteration_bounds = array<i64: 1>, scalar_prefetch = 0 : i64, scratch_operands = 0 : i64, tpu.core_type = #tpu.core_type<tc>, window_params = [{transform_indices = @transform_0, window_bounds = array<i64: 8, 80>}, {pipeline_mode = #tpu.pipeline_mode<synchronous>, transform_indices = @transform_1, window_bounds = array<i64: 80, 80>}, {pipeline_mode = #tpu.pipeline_mode<synchronous>, transform_indices = @transform_2, window_bounds = array<i64: 3, 80>}, {pipeline_mode = #tpu.pipeline_mode<synchronous>, transform_indices = @transform_3, window_bounds = array<i64: 80, 40>}, {pipeline_mode = #tpu.pipeline_mode<synchronous>, transform_indices = @transform_4, window_bounds = array<i64: 3, 40>}, {pipeline_mode = #tpu.pipeline_mode<synchronous>, transform_indices = @transform_5, window_bounds = array<i64: 40, 32>}, {pipeline_mode = #tpu.pipeline_mode<synchronous>, transform_indices = @transform_6, window_bounds = array<i64: 3, 32>}, {transform_indices = @transform_7, window_bounds = array<i64: 8, 32>}]} {
    %c0 = arith.constant 0 : index
    %c0_0 = arith.constant 0 : index
    %0 = vector.load %arg1[%c0, %c0_0] : memref<8x80xf32, #tpu.memory_space<vmem>>, vector<8x80xf32>
    %c0_1 = arith.constant 0 : index
    %c0_2 = arith.constant 0 : index
    %1 = vector.load %arg2[%c0_1, %c0_2] : memref<80x80xf32, #tpu.memory_space<vmem>>, vector<80x80xf32>
    %c0_3 = arith.constant 0 : index
    %c0_4 = arith.constant 0 : index
    %2 = vector.load %arg3[%c0_3, %c0_4] : memref<3x80xf32, #tpu.memory_space<vmem>>, vector<3x80xf32>
    %cst = arith.constant dense<0.000000e+00> : vector<8x80xf32>
    %3 = tpu.matmul %0, %1, %cst {dimension_numbers = #tpu.dot_dimension_numbers<[1], [0], [0], [1], [0, 0, 1, 1], [], []>} : vector<8x80xf32>, vector<80x80xf32>, vector<8x80xf32> -> vector<8x80xf32>
    %4 = vector.extract_strided_slice %2 {offsets = [0, 0], sizes = [1, 80], strides = [1, 1]} : vector<3x80xf32> to vector<1x80xf32>
    %5 = vector.extract_strided_slice %2 {offsets = [1, 0], sizes = [1, 80], strides = [1, 1]} : vector<3x80xf32> to vector<1x80xf32>
    %6 = vector.extract_strided_slice %2 {offsets = [2, 0], sizes = [1, 80], strides = [1, 1]} : vector<3x80xf32> to vector<1x80xf32>
    %7 = vector.broadcast %4 : vector<1x80xf32> to vector<8x80xf32>
    %8 = arith.addf %3, %7 : vector<8x80xf32>
    %cst_5 = arith.constant 0.000000e+00 : f32
    %9 = vector.broadcast %cst_5 : f32 to vector<8x80xf32>
    %10 = arith.maximumf %8, %9 : vector<8x80xf32>
    %cst_6 = arith.constant dense<0.000000e+00> : vector<8xf32>
    %11 = vector.multi_reduction <add>, %10, %cst_6 [1] : vector<8x80xf32> to vector<8xf32>
    %12 = vector.shape_cast %11 : vector<8xf32> to vector<8x1xf32>
    %cst_7 = arith.constant 8.000000e+01 : f32
    %13 = vector.broadcast %cst_7 : f32 to vector<8x1xf32>
    %14 = arith.divf %12, %13 : vector<8x1xf32>
    %15 = arith.mulf %10, %10 : vector<8x80xf32>
    %cst_8 = arith.constant dense<0.000000e+00> : vector<8xf32>
    %16 = vector.multi_reduction <add>, %15, %cst_8 [1] : vector<8x80xf32> to vector<8xf32>
    %17 = vector.shape_cast %16 : vector<8xf32> to vector<8x1xf32>
    %cst_9 = arith.constant 8.000000e+01 : f32
    %18 = vector.broadcast %cst_9 : f32 to vector<8x1xf32>
    %19 = arith.divf %17, %18 : vector<8x1xf32>
    %20 = arith.mulf %14, %14 : vector<8x1xf32>
    %21 = arith.subf %19, %20 : vector<8x1xf32>
    %cst_10 = arith.constant 0.000000e+00 : f32
    %22 = vector.broadcast %cst_10 : f32 to vector<8x1xf32>
    %23 = arith.maximumf %21, %22 : vector<8x1xf32>
    %24 = vector.broadcast %14 : vector<8x1xf32> to vector<8x80xf32>
    %25 = arith.subf %10, %24 : vector<8x80xf32>
    %cst_11 = arith.constant 9.99999974E-6 : f32
    %26 = vector.broadcast %cst_11 : f32 to vector<8x1xf32>
    %27 = arith.addf %23, %26 : vector<8x1xf32>
    %28 = math.rsqrt %27 : vector<8x1xf32>
    %29 = vector.broadcast %28 : vector<8x1xf32> to vector<8x80xf32>
    %30 = arith.mulf %25, %29 : vector<8x80xf32>
    %31 = vector.broadcast %5 : vector<1x80xf32> to vector<8x80xf32>
    %32 = arith.mulf %30, %31 : vector<8x80xf32>
    %33 = vector.broadcast %6 : vector<1x80xf32> to vector<8x80xf32>
    %34 = arith.addf %32, %33 : vector<8x80xf32>
    %c0_12 = arith.constant 0 : index
    %c0_13 = arith.constant 0 : index
    %35 = vector.load %arg4[%c0_12, %c0_13] : memref<80x40xf32, #tpu.memory_space<vmem>>, vector<80x40xf32>
    %c0_14 = arith.constant 0 : index
    %c0_15 = arith.constant 0 : index
    %36 = vector.load %arg5[%c0_14, %c0_15] : memref<3x40xf32, #tpu.memory_space<vmem>>, vector<3x40xf32>
    %cst_16 = arith.constant dense<0.000000e+00> : vector<8x40xf32>
    %37 = tpu.matmul %34, %35, %cst_16 {dimension_numbers = #tpu.dot_dimension_numbers<[1], [0], [0], [1], [0, 0, 1, 1], [], []>} : vector<8x80xf32>, vector<80x40xf32>, vector<8x40xf32> -> vector<8x40xf32>
    %38 = vector.extract_strided_slice %36 {offsets = [0, 0], sizes = [1, 40], strides = [1, 1]} : vector<3x40xf32> to vector<1x40xf32>
    %39 = vector.extract_strided_slice %36 {offsets = [1, 0], sizes = [1, 40], strides = [1, 1]} : vector<3x40xf32> to vector<1x40xf32>
    %40 = vector.extract_strided_slice %36 {offsets = [2, 0], sizes = [1, 40], strides = [1, 1]} : vector<3x40xf32> to vector<1x40xf32>
    %41 = vector.broadcast %38 : vector<1x40xf32> to vector<8x40xf32>
    %42 = arith.addf %37, %41 : vector<8x40xf32>
    %cst_17 = arith.constant 0.000000e+00 : f32
    %43 = vector.broadcast %cst_17 : f32 to vector<8x40xf32>
    %44 = arith.maximumf %42, %43 : vector<8x40xf32>
    %cst_18 = arith.constant dense<0.000000e+00> : vector<8xf32>
    %45 = vector.multi_reduction <add>, %44, %cst_18 [1] : vector<8x40xf32> to vector<8xf32>
    %46 = vector.shape_cast %45 : vector<8xf32> to vector<8x1xf32>
    %cst_19 = arith.constant 4.000000e+01 : f32
    %47 = vector.broadcast %cst_19 : f32 to vector<8x1xf32>
    %48 = arith.divf %46, %47 : vector<8x1xf32>
    %49 = arith.mulf %44, %44 : vector<8x40xf32>
    %cst_20 = arith.constant dense<0.000000e+00> : vector<8xf32>
    %50 = vector.multi_reduction <add>, %49, %cst_20 [1] : vector<8x40xf32> to vector<8xf32>
    %51 = vector.shape_cast %50 : vector<8xf32> to vector<8x1xf32>
    %cst_21 = arith.constant 4.000000e+01 : f32
    %52 = vector.broadcast %cst_21 : f32 to vector<8x1xf32>
    %53 = arith.divf %51, %52 : vector<8x1xf32>
    %54 = arith.mulf %48, %48 : vector<8x1xf32>
    %55 = arith.subf %53, %54 : vector<8x1xf32>
    %cst_22 = arith.constant 0.000000e+00 : f32
    %56 = vector.broadcast %cst_22 : f32 to vector<8x1xf32>
    %57 = arith.maximumf %55, %56 : vector<8x1xf32>
    %58 = vector.broadcast %48 : vector<8x1xf32> to vector<8x40xf32>
    %59 = arith.subf %44, %58 : vector<8x40xf32>
    %cst_23 = arith.constant 9.99999974E-6 : f32
    %60 = vector.broadcast %cst_23 : f32 to vector<8x1xf32>
    %61 = arith.addf %57, %60 : vector<8x1xf32>
    %62 = math.rsqrt %61 : vector<8x1xf32>
    %63 = vector.broadcast %62 : vector<8x1xf32> to vector<8x40xf32>
    %64 = arith.mulf %59, %63 : vector<8x40xf32>
    %65 = vector.broadcast %39 : vector<1x40xf32> to vector<8x40xf32>
    %66 = arith.mulf %64, %65 : vector<8x40xf32>
    %67 = vector.broadcast %40 : vector<1x40xf32> to vector<8x40xf32>
    %68 = arith.addf %66, %67 : vector<8x40xf32>
    %c0_24 = arith.constant 0 : index
    %c0_25 = arith.constant 0 : index
    %69 = vector.load %arg6[%c0_24, %c0_25] : memref<40x32xf32, #tpu.memory_space<vmem>>, vector<40x32xf32>
    %c0_26 = arith.constant 0 : index
    %c0_27 = arith.constant 0 : index
    %70 = vector.load %arg7[%c0_26, %c0_27] : memref<3x32xf32, #tpu.memory_space<vmem>>, vector<3x32xf32>
    %cst_28 = arith.constant dense<0.000000e+00> : vector<8x32xf32>
    %71 = tpu.matmul %68, %69, %cst_28 {dimension_numbers = #tpu.dot_dimension_numbers<[1], [0], [0], [1], [0, 0, 1, 1], [], []>} : vector<8x40xf32>, vector<40x32xf32>, vector<8x32xf32> -> vector<8x32xf32>
    %72 = vector.extract_strided_slice %70 {offsets = [0, 0], sizes = [1, 32], strides = [1, 1]} : vector<3x32xf32> to vector<1x32xf32>
    %73 = vector.extract_strided_slice %70 {offsets = [1, 0], sizes = [1, 32], strides = [1, 1]} : vector<3x32xf32> to vector<1x32xf32>
    %74 = vector.extract_strided_slice %70 {offsets = [2, 0], sizes = [1, 32], strides = [1, 1]} : vector<3x32xf32> to vector<1x32xf32>
    %75 = vector.broadcast %72 : vector<1x32xf32> to vector<8x32xf32>
    %76 = arith.addf %71, %75 : vector<8x32xf32>
    %cst_29 = arith.constant 0.000000e+00 : f32
    %77 = vector.broadcast %cst_29 : f32 to vector<8x32xf32>
    %78 = arith.maximumf %76, %77 : vector<8x32xf32>
    %cst_30 = arith.constant dense<0.000000e+00> : vector<8xf32>
    %79 = vector.multi_reduction <add>, %78, %cst_30 [1] : vector<8x32xf32> to vector<8xf32>
    %80 = vector.shape_cast %79 : vector<8xf32> to vector<8x1xf32>
    %cst_31 = arith.constant 3.200000e+01 : f32
    %81 = vector.broadcast %cst_31 : f32 to vector<8x1xf32>
    %82 = arith.divf %80, %81 : vector<8x1xf32>
    %83 = arith.mulf %78, %78 : vector<8x32xf32>
    %cst_32 = arith.constant dense<0.000000e+00> : vector<8xf32>
    %84 = vector.multi_reduction <add>, %83, %cst_32 [1] : vector<8x32xf32> to vector<8xf32>
    %85 = vector.shape_cast %84 : vector<8xf32> to vector<8x1xf32>
    %cst_33 = arith.constant 3.200000e+01 : f32
    %86 = vector.broadcast %cst_33 : f32 to vector<8x1xf32>
    %87 = arith.divf %85, %86 : vector<8x1xf32>
    %88 = arith.mulf %82, %82 : vector<8x1xf32>
    %89 = arith.subf %87, %88 : vector<8x1xf32>
    %cst_34 = arith.constant 0.000000e+00 : f32
    %90 = vector.broadcast %cst_34 : f32 to vector<8x1xf32>
    %91 = arith.maximumf %89, %90 : vector<8x1xf32>
    %92 = vector.broadcast %82 : vector<8x1xf32> to vector<8x32xf32>
    %93 = arith.subf %78, %92 : vector<8x32xf32>
    %cst_35 = arith.constant 9.99999974E-6 : f32
    %94 = vector.broadcast %cst_35 : f32 to vector<8x1xf32>
    %95 = arith.addf %91, %94 : vector<8x1xf32>
    %96 = math.rsqrt %95 : vector<8x1xf32>
    %97 = vector.broadcast %96 : vector<8x1xf32> to vector<8x32xf32>
    %98 = arith.mulf %93, %97 : vector<8x32xf32>
    %99 = vector.broadcast %73 : vector<1x32xf32> to vector<8x32xf32>
    %100 = arith.mulf %98, %99 : vector<8x32xf32>
    %101 = vector.broadcast %74 : vector<1x32xf32> to vector<8x32xf32>
    %102 = arith.addf %100, %101 : vector<8x32xf32>
    %c0_36 = arith.constant 0 : index
    %c0_37 = arith.constant 0 : index
    %103 = vector.load %arg8[%c0_36, %c0_37] : memref<8x32xf32, #tpu.memory_space<vmem>>, vector<8x32xf32>
    tpu.vector_store %arg8[%c0_36, %c0_37], %102 {strides = array<i32>} : memref<8x32xf32, #tpu.memory_space<vmem>>, vector<8x32xf32>,
    return
  }
  func.func @transform_0(%arg0: i32) -> (i32, i32) {
    %c0_i32 = arith.constant 0 : i32
    %c0_i32_0 = arith.constant 0 : i32
    return %arg0, %c0_i32 : i32, i32
  }
  func.func @transform_1(%arg0: i32) -> (i32, i32) {
    %c0_i32 = arith.constant 0 : i32
    %c0_i32_0 = arith.constant 0 : i32
    %c0_i32_1 = arith.constant 0 : i32
    return %c0_i32, %c0_i32_0 : i32, i32
  }
  func.func @transform_2(%arg0: i32) -> (i32, i32) {
    %c0_i32 = arith.constant 0 : i32
    %c0_i32_0 = arith.constant 0 : i32
    %c0_i32_1 = arith.constant 0 : i32
    return %c0_i32, %c0_i32_0 : i32, i32
  }
  func.func @transform_3(%arg0: i32) -> (i32, i32) {
    %c0_i32 = arith.constant 0 : i32
    %c0_i32_0 = arith.constant 0 : i32
    %c0_i32_1 = arith.constant 0 : i32
    return %c0_i32, %c0_i32_0 : i32, i32
  }
  func.func @transform_4(%arg0: i32) -> (i32, i32) {
    %c0_i32 = arith.constant 0 : i32
    %c0_i32_0 = arith.constant 0 : i32
    %c0_i32_1 = arith.constant 0 : i32
    return %c0_i32, %c0_i32_0 : i32, i32
  }
  func.func @transform_5(%arg0: i32) -> (i32, i32) {
    %c0_i32 = arith.constant 0 : i32
    %c0_i32_0 = arith.constant 0 : i32
    %c0_i32_1 = arith.constant 0 : i32
    return %c0_i32, %c0_i32_0 : i32, i32
  }
  func.func @transform_6(%arg0: i32) -> (i32, i32) {
    %c0_i32 = arith.constant 0 : i32
    %c0_i32_0 = arith.constant 0 : i32
    %c0_i32_1 = arith.constant 0 : i32
    return %c0_i32, %c0_i32_0 : i32, i32
  }
  func.func @transform_7(%arg0: i32) -> (i32, i32) {
    %c0_i32 = arith.constant 0 : i32
    %c0_i32_0 = arith.constant 0 : i32
    return %arg0, %c0_i32 : i32, i32
  }
}

</mosaic_0001>

<llo_original>
// kernel: tpu_custom_call.1
$region0: #{tpu_custom_call.1}
  #allocation0 [shape = 'u32[]', space=smem, size = 0x4, offset = 0x4, fixed_abs, tag = 'smem constant byte address 0x4 - core index']
  #allocation1 [shape = 'u32[144,128]{1,0:T(1,128)}', space=vmem, size = 0x12000, scoped, tag = 'internal scratch']
  %s0 = inlined_call_operand.vmem [shape: f32[8,80], index: 0, kind: input, shape index: {}]
  %s1 = inlined_call_operand.vmem [shape: f32[80,80], index: 1, kind: input, shape index: {}]
  %s2 = inlined_call_operand.vmem [shape: f32[3,80], index: 2, kind: input, shape index: {}]
  %s3 = inlined_call_operand.vmem [shape: f32[80,40], index: 3, kind: input, shape index: {}]
  %s4 = inlined_call_operand.vmem [shape: f32[3,40], index: 4, kind: input, shape index: {}]
  %s5 = inlined_call_operand.vmem [shape: f32[40,32], index: 5, kind: input, shape index: {}]
  %s6 = inlined_call_operand.vmem [shape: f32[3,32], index: 6, kind: input, shape index: {}]
  %s7 = inlined_call_operand.hbm [shape: f32[8,32], index: 7, kind: output, shape index: {}]
  %s8 = sld [smem:[#allocation0]]
  $region38: #{tpu_custom_call.1} parent=0
    _
  %s10 = ssub.s32 1, %s8
  %s11 = scalar_select 0, %s10, %s8
  $region1: #{tpu_custom_call.1} parent=0
    #allocation2 [shape = 'u8[4096]{0}', space=vmem, size = 0x1000, scoped, tag = 'output window, operand 0, single buffered']
    #allocation3 [shape = 's32[1]{0}', space=sflag, size = 0x4, scoped, tag = 'scoped memory for tpu_custom_call.1']
    %12 = vsyncpa [#allocation3], 0
    // Predicated region
    $region2: #{tpu_custom_call.1} parent=1 // pred_check
      _
    $region3: #{tpu_custom_call.1} parent=1 // pred_check_branch
      %14 = sbr.rel (0) target = $region5
    $region4: #{tpu_custom_call.1} parent=1 // pred_region
      _
    $region5: #{tpu_custom_call.1} parent=1 // pred_fallthru
      _
    // Predicated region
    $region6: #{tpu_custom_call.1} parent=1 // pred_check
      _
    $region7: #{tpu_custom_call.1} parent=1 // pred_check_branch
      %16 = sbr.rel (0) target = $region9
    $region8: #{tpu_custom_call.1} parent=1 // pred_region
      _
    $region9: #{tpu_custom_call.1} parent=1 // pred_fallthru
      _
    // Predicated region
    $region10: #{tpu_custom_call.1} parent=1 // pred_check
      _
    $region11: #{tpu_custom_call.1} parent=1 // pred_check_branch
      %18 = sbr.rel (0) target = $region13
    $region12: #{tpu_custom_call.1} parent=1 // pred_region
      _
    $region13: #{tpu_custom_call.1} parent=1 // pred_fallthru
      _
    // Predicated region
    $region14: #{tpu_custom_call.1} parent=1 // pred_check
      _
    $region15: #{tpu_custom_call.1} parent=1 // pred_check_branch
      %20 = sbr.rel (0) target = $region17
    $region16: #{tpu_custom_call.1} parent=1 // pred_region
      _
    $region17: #{tpu_custom_call.1} parent=1 // pred_fallthru
      _
    // Predicated region
    $region18: #{tpu_custom_call.1} parent=1 // pred_check
      _
    $region19: #{tpu_custom_call.1} parent=1 // pred_check_branch
      %22 = sbr.rel (0) target = $region21
    $region20: #{tpu_custom_call.1} parent=1 // pred_region
      _
    $region21: #{tpu_custom_call.1} parent=1 // pred_fallthru
      _
    // Predicated region
    $region22: #{tpu_custom_call.1} parent=1 // pred_check
      _
    $region23: #{tpu_custom_call.1} parent=1 // pred_check_branch
      %24 = sbr.rel (0) target = $region25
    $region24: #{tpu_custom_call.1} parent=1 // pred_region
      _
    $region25: #{tpu_custom_call.1} parent=1 // pred_fallthru
      _
    // Predicated region
    $region26: #{tpu_custom_call.1} parent=1 // pred_check
      _
    $region27: #{tpu_custom_call.1} parent=1 // pred_check_branch
      %26 = sbr.rel (0) target = $region29
    $region28: #{tpu_custom_call.1} parent=1 // pred_region
      _
    $region29: #{tpu_custom_call.1} parent=1 // pred_fallthru
      _
    %v27 = vld [vmem:[%s0] sm:$0xff]
    %v28 = vld [vmem:[%s1] sm:$0xff]
    %v29 = vld [vmem:[%s1 + $0x8] sm:$0xff]
    %v30 = vld [vmem:[%s1 + $0x10] sm:$0xff]
    %v31 = vld [vmem:[%s1 + $0x18] sm:$0xff]
    %v32 = vld [vmem:[%s1 + $0x20] sm:$0xff]
    %v33 = vld [vmem:[%s1 + $0x28] sm:$0xff]
    %v34 = vld [vmem:[%s1 + $0x30] sm:$0xff]
    %v35 = vld [vmem:[%s1 + $0x38] sm:$0xff]
    %v36 = vld [vmem:[%s1 + $0x40] sm:$0xff]
    %v37 = vld [vmem:[%s1 + $0x48] sm:$0xff]
    %v38 = vld [vmem:[%s2] sm:$0x7]
    %v39 = vlaneseq
    %v40 = vshrl.u32 %v39, 7
    %v41 = vsub.s32 0, %v40
    %v42 = vrot.slane %v38, %v41
    %vm43 = vcmask 654336
    %v45 = vsel %vm43, %v27, 0
    %47 = vmatprep.subr.mxu0 0.0
    %48 = vmatpush1.msra.mxu0 %v28
    %49 = vmatprep.subr.mxu0 0.0
    %50 = vmatpush1.msra.mxu0 %v29
    %51 = vmatprep.subr.mxu0 0.0
    %52 = vmatpush1.msra.mxu0 %v30
    %53 = vmatprep.subr.mxu0 0.0
    %54 = vmatpush1.msra.mxu0 %v31
    %55 = vmatprep.subr.mxu0 0.0
    %56 = vmatpush1.msra.mxu0 %v32
    %57 = vmatprep.subr.mxu0 0.0
    %58 = vmatpush1.msra.mxu0 %v33
    %59 = vmatprep.subr.mxu0 0.0
    %60 = vmatpush1.msra.mxu0 %v34
    %61 = vmatprep.subr.mxu0 0.0
    %62 = vmatpush1.msra.mxu0 %v35
    %63 = vmatprep.subr.mxu0 0.0
    %64 = vmatpush1.msra.mxu0 %v36
    %65 = vmatprep.subr.mxu0 0.0
    %66 = vmatpush1.msra.mxu0 %v37
    %67 = vmatprep.subr.mxu0 0.0
    %68 = vmatpush1.msra.mxu0 0.0
    %69 = vmatprep.subr.mxu0 0.0
    %70 = vmatpush1.msra.mxu0 0.0
    %71 = vmatprep.subr.mxu0 0.0
    %72 = vmatpush1.msra.mxu0 0.0
    %73 = vmatprep.subr.mxu0 0.0
    %74 = vmatpush1.msra.mxu0 0.0
    %75 = vmatprep.subr.mxu0 0.0
    %76 = vmatpush1.msra.mxu0 0.0
    %77 = vmatprep.subr.mxu0 0.0
    %78 = vmatpush1.msra.mxu0 0.0
    %79 = vmatprep.subr.mxu0 0.0
    %80 = vmatpush1.msra.mxu0 0.0
    %81 = vmatprep.subr.mxu0 0.0
    %82 = vmatpush1.msra.mxu0 0.0
    %83 = vmatprep.subr.mxu0 0.0
    %84 = vmatpush1.msra.mxu0 0.0
    %85 = vmatprep.subr.mxu0 0.0
    %86 = vmatpush1.msra.mxu0 0.0
    %87 = vmatprep.subr.mxu0 0.0
    %88 = vmatpush1.msra.mxu0 0.0
    %89 = vmatprep.subr.mxu0 0.0
    %90 = vmatpush1.msra.mxu0 0.0
    %91 = vmatprep.subr.mxu0 0.0
    %92 = vmatpush1.msra.mxu0 0.0
    %93 = vmatprep.subr.mxu0 0.0
    %94 = vmatpush1.msra.mxu0 0.0
    %95 = vmatprep.subr.mxu0 0.0
    %96 = vmatpush1.msra.mxu0 0.0
    %97 = vmatprep.subr.mxu0 0.0
    %98 = vmatpush1.msra.mxu0 0.0
    %99 = vmatprep.subr.mxu0 0.0
    %100 = vmatpush1.msra.mxu0 0.0
    %101 = vmatprep.subr.mxu0 0.0
    %102 = vmatpush1.msra.mxu0 0.0
    %103 = vmatprep.subr.mxu0 0.0
    %104 = vmatpush1.msra.mxu0 0.0
    %105 = vmatprep.subr.mxu0 0.0
    %106 = vmatpush1.msra.mxu0 0.0
    %107 = vmatprep.subr.mxu0 0.0
    %108 = vmatpush1.msra.mxu0 0.0
    %109 = vmatprep.subr.mxu0 0.0
    %110 = vmatpush1.msra.mxu0 0.0
    %111 = vmatprep.mubr.f32.mxu0 0.0
    %112 = vmatmul.mubr.f32.gmra.mrb[0].mxu0 %v45
    %v113 = vpop.f32.mrb[0].mxu0
    %v114 = vadd.f32 %v42, %v113
    %v115 = vpop.f32.mrb[0].mxu0
    %116 = vdwg.mxu0
    %v117 = vmax.f32 %v114, 0.0
    %v118 = vsel %vm43, %v117, 0.0
    %119 = vadd.xlane.f32.xlu0 %v118
    %v120 = vpop.xlane.xlu0 %119
    %v121 = vrcp.pop 80.0
    %v122 = vmul.f32 %v120, %v121
    %v123 = vmul.f32 %v117, %v117
    %v124 = vsel %vm43, %v123, 0.0
    %125 = vadd.xlane.f32.xlu0 %v124
    %v126 = vpop.xlane.xlu0 %125
    %v127 = vmul.f32 %v126, %v121
    %v128 = vmul.f32 %v122, %v122
    %v129 = vsub.f32 %v127, %v128
    %v130 = vmax.f32 %v129, 0.0
    %v131 = vsub.f32 %v117, %v122
    %v132 = vadd.f32 %v130, 1e-05
    %v133 = vrsqrt.pop %v132
    %v134 = vmul.f32 %v131, %v133
    %v135 = vlaneseq
    %v136 = vshrl.u32 %v135, 7
    %v137 = vsub.s32 1, %v136
    %v138 = vrot.slane %v38, %v137
    %v139 = vmul.f32 %v134, %v138
    %v140 = vlaneseq
    %v141 = vshrl.u32 %v140, 7
    %v142 = vsub.s32 2, %v141
    %v143 = vrot.slane %v38, %v142
    %v144 = vadd.f32 %v139, %v143
    %v145 = vld [vmem:[%s3] sm:$0xff]
    %v146 = vld [vmem:[%s3 + $0x8] sm:$0xff]
    %v147 = vld [vmem:[%s3 + $0x10] sm:$0xff]
    %v148 = vld [vmem:[%s3 + $0x18] sm:$0xff]
    %v149 = vld [vmem:[%s3 + $0x20] sm:$0xff]
    %v150 = vld [vmem:[%s3 + $0x28] sm:$0xff]
    %v151 = vld [vmem:[%s3 + $0x30] sm:$0xff]
    %v152 = vld [vmem:[%s3 + $0x38] sm:$0xff]
    %v153 = vld [vmem:[%s3 + $0x40] sm:$0xff]
    %v154 = vld [vmem:[%s3 + $0x48] sm:$0xff]
    %v155 = vld [vmem:[%s4] sm:$0x7]
    %v156 = vlaneseq
    %v157 = vshrl.u32 %v156, 7
    %v158 = vsub.s32 0, %v157
    %v159 = vrot.slane %v155, %v158
    %v161 = vsel %vm43, %v144, 0
    %163 = vmatprep.subr.mxu0 0.0
    %164 = vmatpush1.msra.mxu0 %v145
    %165 = vmatprep.subr.mxu0 0.0
    %166 = vmatpush1.msra.mxu0 %v146
    %167 = vmatprep.subr.mxu0 0.0
    %168 = vmatpush1.msra.mxu0 %v147
    %169 = vmatprep.subr.mxu0 0.0
    %170 = vmatpush1.msra.mxu0 %v148
    %171 = vmatprep.subr.mxu0 0.0
    %172 = vmatpush1.msra.mxu0 %v149
    %173 = vmatprep.subr.mxu0 0.0
    %174 = vmatpush1.msra.mxu0 %v150
    %175 = vmatprep.subr.mxu0 0.0
    %176 = vmatpush1.msra.mxu0 %v151
    %177 = vmatprep.subr.mxu0 0.0
    %178 = vmatpush1.msra.mxu0 %v152
    %179 = vmatprep.subr.mxu0 0.0
    %180 = vmatpush1.msra.mxu0 %v153
    %181 = vmatprep.subr.mxu0 0.0
    %182 = vmatpush1.msra.mxu0 %v154
    %183 = vmatprep.subr.mxu0 0.0
    %184 = vmatpush1.msra.mxu0 0.0
    %185 = vmatprep.subr.mxu0 0.0
    %186 = vmatpush1.msra.mxu0 0.0
    %187 = vmatprep.subr.mxu0 0.0
    %188 = vmatpush1.msra.mxu0 0.0
    %189 = vmatprep.subr.mxu0 0.0
    %190 = vmatpush1.msra.mxu0 0.0
    %191 = vmatprep.subr.mxu0 0.0
    %192 = vmatpush1.msra.mxu0 0.0
    %193 = vmatprep.subr.mxu0 0.0
    %194 = vmatpush1.msra.mxu0 0.0
    %195 = vmatprep.subr.mxu0 0.0
    %196 = vmatpush1.msra.mxu0 0.0
    %197 = vmatprep.subr.mxu0 0.0
    %198 = vmatpush1.msra.mxu0 0.0
    %199 = vmatprep.subr.mxu0 0.0
    %200 = vmatpush1.msra.mxu0 0.0
    %201 = vmatprep.subr.mxu0 0.0
    %202 = vmatpush1.msra.mxu0 0.0
    %203 = vmatprep.subr.mxu0 0.0
    %204 = vmatpush1.msra.mxu0 0.0
    %205 = vmatprep.subr.mxu0 0.0
    %206 = vmatpush1.msra.mxu0 0.0
    %207 = vmatprep.subr.mxu0 0.0
    %208 = vmatpush1.msra.mxu0 0.0
    %209 = vmatprep.subr.mxu0 0.0
    %210 = vmatpush1.msra.mxu0 0.0
    %211 = vmatprep.subr.mxu0 0.0
    %212 = vmatpush1.msra.mxu0 0.0
    %213 = vmatprep.subr.mxu0 0.0
    %214 = vmatpush1.msra.mxu0 0.0
    %215 = vmatprep.subr.mxu0 0.0
    %216 = vmatpush1.msra.mxu0 0.0
    %217 = vmatprep.subr.mxu0 0.0
    %218 = vmatpush1.msra.mxu0 0.0
    %219 = vmatprep.subr.mxu0 0.0
    %220 = vmatpush1.msra.mxu0 0.0
    %221 = vmatprep.subr.mxu0 0.0
    %222 = vmatpush1.msra.mxu0 0.0
    %223 = vmatprep.subr.mxu0 0.0
    %224 = vmatpush1.msra.mxu0 0.0
    %225 = vmatprep.subr.mxu0 0.0
    %226 = vmatpush1.msra.mxu0 0.0
    %227 = vmatprep.mubr.f32.mxu0 0.0
    %228 = vmatmul.mubr.f32.gmra.mrb[0].mxu0 %v161
    %v229 = vpop.f32.mrb[0].mxu0
    %v230 = vadd.f32 %v159, %v229
    %v231 = vpop.f32.mrb[0].mxu0
    %232 = vdwg.mxu0
    %v233 = vmax.f32 %v230, 0.0
    %vm234 = vcmask 326656
    %v235 = vsel %vm234, %v233, 0.0
    %236 = vadd.xlane.f32.xlu0 %v235
    %v237 = vpop.xlane.xlu0 %236
    %v238 = vrcp.pop 40.0
    %v239 = vmul.f32 %v237, %v238
    %v240 = vmul.f32 %v233, %v233
    %v241 = vsel %vm234, %v240, 0.0
    %242 = vadd.xlane.f32.xlu0 %v241
    %v243 = vpop.xlane.xlu0 %242
    %v244 = vmul.f32 %v243, %v238
    %v245 = vmul.f32 %v239, %v239
    %v246 = vsub.f32 %v244, %v245
    %v247 = vmax.f32 %v246, 0.0
    %v248 = vsub.f32 %v233, %v239
    %v249 = vadd.f32 %v247, 1e-05
    %v250 = vrsqrt.pop %v249
    %v251 = vmul.f32 %v248, %v250
    %v252 = vlaneseq
    %v253 = vshrl.u32 %v252, 7
    %v254 = vsub.s32 1, %v253
    %v255 = vrot.slane %v155, %v254
    %v256 = vmul.f32 %v251, %v255
    %v257 = vlaneseq
    %v258 = vshrl.u32 %v257, 7
    %v259 = vsub.s32 2, %v258
    %v260 = vrot.slane %v155, %v259
    %v261 = vadd.f32 %v256, %v260
    %v262 = vld [vmem:[%s5] sm:$0xff]
    %v263 = vld [vmem:[%s5 + $0x8] sm:$0xff]
    %v264 = vld [vmem:[%s5 + $0x10] sm:$0xff]
    %v265 = vld [vmem:[%s5 + $0x18] sm:$0xff]
    %v266 = vld [vmem:[%s5 + $0x20] sm:$0xff]
    %v267 = vld [vmem:[%s6] sm:$0x7]
    %v268 = vlaneseq
    %v269 = vshrl.u32 %v268, 7
    %v270 = vsub.s32 0, %v269
    %v271 = vrot.slane %v267, %v270
    %v273 = vsel %vm234, %v261, 0
    %275 = vmatprep.subr.mxu0 0.0
    %276 = vmatpush1.msra.mxu0 %v262
    %277 = vmatprep.subr.mxu0 0.0
    %278 = vmatpush1.msra.mxu0 %v263
    %279 = vmatprep.subr.mxu0 0.0
    %280 = vmatpush1.msra.mxu0 %v264
    %281 = vmatprep.subr.mxu0 0.0
    %282 = vmatpush1.msra.mxu0 %v265
    %283 = vmatprep.subr.mxu0 0.0
    %284 = vmatpush1.msra.mxu0 %v266
    %285 = vmatprep.subr.mxu0 0.0
    %286 = vmatpush1.msra.mxu0 0.0
    %287 = vmatprep.subr.mxu0 0.0
    %288 = vmatpush1.msra.mxu0 0.0
    %289 = vmatprep.subr.mxu0 0.0
    %290 = vmatpush1.msra.mxu0 0.0
    %291 = vmatprep.subr.mxu0 0.0
    %292 = vmatpush1.msra.mxu0 0.0
    %293 = vmatprep.subr.mxu0 0.0
    %294 = vmatpush1.msra.mxu0 0.0
    %295 = vmatprep.subr.mxu0 0.0
    %296 = vmatpush1.msra.mxu0 0.0
    %297 = vmatprep.subr.mxu0 0.0
    %298 = vmatpush1.msra.mxu0 0.0
    %299 = vmatprep.subr.mxu0 0.0
    %300 = vmatpush1.msra.mxu0 0.0
    %301 = vmatprep.subr.mxu0 0.0
    %302 = vmatpush1.msra.mxu0 0.0
    %303 = vmatprep.subr.mxu0 0.0
    %304 = vmatpush1.msra.mxu0 0.0
    %305 = vmatprep.subr.mxu0 0.0
    %306 = vmatpush1.msra.mxu0 0.0
    %307 = vmatprep.subr.mxu0 0.0
    %308 = vmatpush1.msra.mxu0 0.0
    %309 = vmatprep.subr.mxu0 0.0
    %310 = vmatpush1.msra.mxu0 0.0
    %311 = vmatprep.subr.mxu0 0.0
    %312 = vmatpush1.msra.mxu0 0.0
    %313 = vmatprep.subr.mxu0 0.0
    %314 = vmatpush1.msra.mxu0 0.0
    %315 = vmatprep.subr.mxu0 0.0
    %316 = vmatpush1.msra.mxu0 0.0
    %317 = vmatprep.subr.mxu0 0.0
    %318 = vmatpush1.msra.mxu0 0.0
    %319 = vmatprep.subr.mxu0 0.0
    %320 = vmatpush1.msra.mxu0 0.0
    %321 = vmatprep.subr.mxu0 0.0
    %322 = vmatpush1.msra.mxu0 0.0
    %323 = vmatprep.subr.mxu0 0.0
    %324 = vmatpush1.msra.mxu0 0.0
    %325 = vmatprep.subr.mxu0 0.0
    %326 = vmatpush1.msra.mxu0 0.0
    %327 = vmatprep.subr.mxu0 0.0
    %328 = vmatpush1.msra.mxu0 0.0
    %329 = vmatprep.subr.mxu0 0.0
    %330 = vmatpush1.msra.mxu0 0.0
    %331 = vmatprep.subr.mxu0 0.0
    %332 = vmatpush1.msra.mxu0 0.0
    %333 = vmatprep.subr.mxu0 0.0
    %334 = vmatpush1.msra.mxu0 0.0
    %335 = vmatprep.subr.mxu0 0.0
    %336 = vmatpush1.msra.mxu0 0.0
    %337 = vmatprep.subr.mxu0 0.0
    %338 = vmatpush1.msra.mxu0 0.0
    %339 = vmatprep.mubr.f32.mxu0 0.0
    %340 = vmatmul.mubr.f32.gmra.mrb[0].mxu0 %v273
    %v341 = vpop.f32.mrb[0].mxu0
    %v342 = vadd.f32 %v271, %v341
    %v343 = vpop.f32.mrb[0].mxu0
    %344 = vdwg.mxu0
    %v345 = vmax.f32 %v342, 0.0
    %vm346 = vcmask 261120
    %v347 = vsel %vm346, %v345, 0.0
    %348 = vadd.xlane.f32.xlu0 %v347
    %v349 = vpop.xlane.xlu0 %348
    %v350 = vrcp.pop 32.0
    %v351 = vmul.f32 %v349, %v350
    %v352 = vmul.f32 %v345, %v345
    %v353 = vsel %vm346, %v352, 0.0
    %354 = vadd.xlane.f32.xlu0 %v353
    %v355 = vpop.xlane.xlu0 %354
    %v356 = vmul.f32 %v355, %v350
    %v357 = vmul.f32 %v351, %v351
    %v358 = vsub.f32 %v356, %v357
    %v359 = vmax.f32 %v358, 0.0
    %v360 = vsub.f32 %v345, %v351
    %v361 = vadd.f32 %v359, 1e-05
    %v362 = vrsqrt.pop %v361
    %v363 = vmul.f32 %v360, %v362
    %v364 = vlaneseq
    %v365 = vshrl.u32 %v364, 7
    %v366 = vsub.s32 1, %v365
    %v367 = vrot.slane %v267, %v366
    %v368 = vmul.f32 %v363, %v367
    %v369 = vlaneseq
    %v370 = vshrl.u32 %v369, 7
    %v371 = vsub.s32 2, %v370
    %v372 = vrot.slane %v267, %v371
    %v373 = vadd.f32 %v368, %v372
    %374 = vst.msk [vmem:[#allocation2] sm:$0xff] %vm346, %v373
    // Predicated region
    $region30: #{tpu_custom_call.1} parent=1 // pred_check
      _
    $region31: #{tpu_custom_call.1} parent=1 // pred_check_branch
      %376 = sbr.rel (0) target = $region33
    $region32: #{tpu_custom_call.1} parent=1 // pred_region
      %s378 = ssub.s32 128, 128
      %379 = vsyncadd [#allocation3], %s378
      %s381 = sshll.u32 [#allocation2], 4
      %s382 = int_to_ptr.vmem [resolvable:$true] %s381
      %384 = dma.vmem_to_hbm [thread:$0]  %s382, 128, %s7, [#allocation3]
    $region33: #{tpu_custom_call.1} parent=1 // pred_fallthru
      _
    // Predicated region
    $region34: #{tpu_custom_call.1} parent=1 // pred_check
      _
    $region35: #{tpu_custom_call.1} parent=1 // pred_check_branch
      %386 = sbr.rel (0) target = $region37
    $region36: #{tpu_custom_call.1} parent=1 // pred_region
      %387 = dma.done [#allocation3], 128
    $region37: #{tpu_custom_call.1} parent=1 // pred_fallthru
      _
    %388 = vsyncpa [#allocation3], 1

</llo_original>
